<compile_context>
chip_gen: v6e
topology: v6e:2x2x1
jax: 0.10.0
libtpu: 0.0.40
codegen_flags: <defaults>
</compile_context>

<pallas_src>
import math

import jax
import jax.numpy as jnp
from jax.experimental import pallas as pl
from jax.experimental.pallas import tpu as pltpu


def _round_up(x, m):
    return (x + m - 1) // m * m


def mlp_final_kernel(x_ref, w1_ref, w2_ref, b2_ref, w3r_ref, b3_ref,
                     out_ref, l1_ref, l2_ref):
    # ---- layer 1: elementwise scale (VPU), broadcast (1,D) over (TB,D) ----
    l1 = w1_ref[...] * x_ref[...]
    l1_ref[...] = l1

    # ---- layer 2: Linear(500 -> 22) + ReLU (MXU, bf16 operands, f32 acc) ---
    l2 = jnp.dot(l1.astype(jnp.bfloat16),
                 w2_ref[...].astype(jnp.bfloat16),
                 preferred_element_type=jnp.float32)
    l2 = jnp.maximum(l2 + b2_ref[...], 0.0)
    l2_ref[...] = l2

    # ---- layer 3: Linear(22 -> 1) + sigmoid, emitted lane-dense -----------
    # (1,H) contracted against (TB,H) on H -> (1,TB): batch ends up on the
    # lane axis, so the store below is a dense unmasked vst per vreg.
    logits = jax.lax.dot_general(
        w3r_ref[...], l2,
        dimension_numbers=(((1,), (1,)), ((), ())),
        preferred_element_type=jnp.float32) + b3_ref[0, 0]
    out_ref[...] = jax.nn.sigmoid(logits)


def mlp_final_forward(x, w1, w2, b2, w3, b3, *, tb=1024):
    """Returns (out[B,1], layer1_out[B,D], layer2_out[B,H])."""
    B, D = x.shape
    H = w2.shape[1]

    # Canonicalize parameter shapes (accepts torch-like 1-D params).
    w1 = w1.reshape(1, D).astype(jnp.float32)
    w2 = w2.reshape(D, H).astype(jnp.float32)
    b2 = b2.reshape(1, H).astype(jnp.float32)
    w3_row = w3.reshape(1, H).astype(jnp.float32)   # (H,1)/(H,) -> row vector
    b3 = b3.reshape(1, 1).astype(jnp.float32)

    # Tile-size selection: single tile for small B; otherwise a multiple of
    # 128 so every block (incl. the lane-dense `out` row) satisfies the
    # (8,128) tiling rule and B_pad divides evenly.
    if B <= tb:
        tb = _round_up(max(B, 1), 8)
    else:
        tb = _round_up(tb, 128)
    b_pad = _round_up(B, tb)
    if b_pad != B:
        x = jnp.pad(x, ((0, b_pad - B), (0, 0)))

    grid = (b_pad // tb,)

    cost = pl.CostEstimate(
        flops=int(2 * b_pad * D * H + b_pad * D + 2 * b_pad * H),
        transcendentals=int(b_pad),                       # sigmoid
        bytes_accessed=int(4 * (2 * b_pad * D + b_pad * H + b_pad
                                + D + D * H + 2 * H + 1)),
    )

    out_row, l1, l2 = pl.pallas_call(
        mlp_final_kernel,
        grid=grid,
        in_specs=[
            pl.BlockSpec((tb, D), lambda i: (i, 0)),            # x (streamed)
            pl.BlockSpec((1, D), lambda i: (0, 0)),             # w1 (resident)
            pl.BlockSpec((D, H), lambda i: (0, 0)),             # W2 (resident)
            pl.BlockSpec((1, H), lambda i: (0, 0)),             # b2 (resident)
            pl.BlockSpec((1, H), lambda i: (0, 0)),             # W3 row (resident)
            pl.BlockSpec(memory_space=pltpu.MemorySpace.SMEM),  # b3 scalar
        ],
        out_specs=[
            pl.BlockSpec((1, tb), lambda i: (0, i)),            # out (lane-dense)
            pl.BlockSpec((tb, D), lambda i: (i, 0)),            # layer1_out
            pl.BlockSpec((tb, H), lambda i: (i, 0)),            # layer2_out
        ],
        out_shape=[
            jax.ShapeDtypeStruct((1, b_pad), jnp.float32),
            jax.ShapeDtypeStruct((b_pad, D), jnp.float32),
            jax.ShapeDtypeStruct((b_pad, H), jnp.float32),
        ],
        compiler_params=pltpu.CompilerParams(
            dimension_semantics=("parallel",)),                 # v7x: 2 TCs
        cost_estimate=cost,
    )(x, w1, w2, b2, w3_row, b3)

    out = out_row[0, :B].reshape(B, 1)
    return out, l1[:B], l2[:B]


def init_params(key):
    """Deterministic params mirroring the PyTorch module's shapes."""
    k1, k2, k3, k4, k5 = jax.random.split(key, 5)
    D, H, O = 500, 22, 1
    w1 = jax.random.normal(k1, (D,), dtype=jnp.float32)          # torch.randn(500)
    bound2 = 1.0 / math.sqrt(D)
    w2 = jax.random.uniform(k2, (D, H), minval=-bound2, maxval=bound2,
                            dtype=jnp.float32)
    b2 = jax.random.uniform(k3, (H,), minval=-bound2, maxval=bound2,
                            dtype=jnp.float32)
    bound3 = 1.0 / math.sqrt(H)
    w3 = jax.random.uniform(k4, (H, O), minval=-bound3, maxval=bound3,
                            dtype=jnp.float32)
    b3 = jax.random.uniform(k5, (O,), minval=-bound3, maxval=bound3,
                            dtype=jnp.float32)
    return w1, w2, b2, w3, b3


if __name__ == "__main__":
    key = jax.random.PRNGKey(0)
    key_x, key_p = jax.random.split(key)

    B, D, H, O = 500, 500, 22, 1      # B=500 + tb=128 exercises 4 pipelined
    x = jax.random.normal(key_x, (B, D), dtype=jnp.float32)  # grid steps + padding
    w1, w2, b2, w3, b3 = init_params(key_p)

    out, l1, l2 = mlp_final_forward(x, w1, w2, b2, w3, b3, tb=128)
    jax.block_until_ready((out, l1, l2))

    # Plain-JAX f32 reference.
    l1_ref = w1[None, :] * x
    l2_ref = jnp.maximum(l1_ref @ w2 + b2[None, :], 0.0)
    out_ref = jax.nn.sigmoid(l2_ref @ w3 + b3[None, :])

    assert out.shape == (B, O) and l1.shape == (B, D) and l2.shape == (B, H)
    assert jnp.allclose(l1, l1_ref, atol=1e-5)
    # layer2/out use a bf16 MXU matmul with f32 accumulation -> loose tolerance.
    assert jnp.allclose(l2, l2_ref, atol=3e-2, rtol=1e-2)
    assert jnp.allclose(out, out_ref, atol=1e-2)

    print("KERNEL_OK")
</pallas_src>

<mosaic_0001>
module attributes {stable_mosaic.version = 11 : i64} {
  func.func @mlp_final_kernel(%arg0: i32, %arg1: memref<128x500xf32, #tpu.memory_space<vmem>>, %arg2: memref<1x500xf32, #tpu.memory_space<vmem>>, %arg3: memref<500x22xf32, #tpu.memory_space<vmem>>, %arg4: memref<1x22xf32, #tpu.memory_space<vmem>>, %arg5: memref<1x22xf32, #tpu.memory_space<vmem>>, %arg6: memref<1x1xf32, #tpu.memory_space<smem>>, %arg7: memref<1x128xf32, #tpu.memory_space<vmem>>, %arg8: memref<128x500xf32, #tpu.memory_space<vmem>>, %arg9: memref<128x22xf32, #tpu.memory_space<vmem>>) attributes {dimension_semantics = [#tpu.dimension_semantics<parallel>], iteration_bounds = array<i64: 4>, scalar_prefetch = 0 : i64, scratch_operands = 0 : i64, tpu.core_type = #tpu.core_type<tc>, window_params = [{transform_indices = @transform_0, window_bounds = array<i64: 128, 500>}, {pipeline_mode = #tpu.pipeline_mode<synchronous>, transform_indices = @transform_1, window_bounds = array<i64: 1, 500>}, {pipeline_mode = #tpu.pipeline_mode<synchronous>, transform_indices = @transform_2, window_bounds = array<i64: 500, 22>}, {pipeline_mode = #tpu.pipeline_mode<synchronous>, transform_indices = @transform_3, window_bounds = array<i64: 1, 22>}, {pipeline_mode = #tpu.pipeline_mode<synchronous>, transform_indices = @transform_4, window_bounds = array<i64: 1, 22>}, {transform_indices = @transform_5, window_bounds = array<i64: 1, 1>}, {transform_indices = @transform_6, window_bounds = array<i64: 1, 128>}, {transform_indices = @transform_7, window_bounds = array<i64: 128, 500>}, {transform_indices = @transform_8, window_bounds = array<i64: 128, 22>}]} {
    %c0 = arith.constant 0 : index
    %c0_0 = arith.constant 0 : index
    %0 = vector.load %arg2[%c0, %c0_0] : memref<1x500xf32, #tpu.memory_space<vmem>>, vector<1x500xf32>
    %c0_1 = arith.constant 0 : index
    %c0_2 = arith.constant 0 : index
    %1 = vector.load %arg1[%c0_1, %c0_2] : memref<128x500xf32, #tpu.memory_space<vmem>>, vector<128x500xf32>
    %2 = vector.broadcast %0 : vector<1x500xf32> to vector<128x500xf32>
    %3 = arith.mulf %2, %1 : vector<128x500xf32>
    %c0_3 = arith.constant 0 : index
    %c0_4 = arith.constant 0 : index
    %4 = vector.load %arg8[%c0_3, %c0_4] : memref<128x500xf32, #tpu.memory_space<vmem>>, vector<128x500xf32>
    tpu.vector_store %arg8[%c0_3, %c0_4], %3 {strides = array<i32>} : memref<128x500xf32, #tpu.memory_space<vmem>>, vector<128x500xf32>,
    %5 = arith.truncf %3 : vector<128x500xf32> to vector<128x500xbf16>
    %c0_5 = arith.constant 0 : index
    %c0_6 = arith.constant 0 : index
    %6 = vector.load %arg3[%c0_5, %c0_6] : memref<500x22xf32, #tpu.memory_space<vmem>>, vector<500x22xf32>
    %7 = arith.truncf %6 : vector<500x22xf32> to vector<500x22xbf16>
    %cst = arith.constant dense<0.000000e+00> : vector<128x22xf32>
    %8 = tpu.matmul %5, %7, %cst {dimension_numbers = #tpu.dot_dimension_numbers<[1], [0], [0], [1], [0, 0, 1, 1], [], []>} : vector<128x500xbf16>, vector<500x22xbf16>, vector<128x22xf32> -> vector<128x22xf32>
    %c0_7 = arith.constant 0 : index
    %c0_8 = arith.constant 0 : index
    %9 = vector.load %arg4[%c0_7, %c0_8] : memref<1x22xf32, #tpu.memory_space<vmem>>, vector<1x22xf32>
    %10 = vector.broadcast %9 : vector<1x22xf32> to vector<128x22xf32>
    %11 = arith.addf %8, %10 : vector<128x22xf32>
    %cst_9 = arith.constant 0.000000e+00 : f32
    %12 = vector.broadcast %cst_9 : f32 to vector<128x22xf32>
    %13 = arith.maximumf %11, %12 : vector<128x22xf32>
    %c0_10 = arith.constant 0 : index
    %c0_11 = arith.constant 0 : index
    %14 = vector.load %arg9[%c0_10, %c0_11] : memref<128x22xf32, #tpu.memory_space<vmem>>, vector<128x22xf32>
    tpu.vector_store %arg9[%c0_10, %c0_11], %13 {strides = array<i32>} : memref<128x22xf32, #tpu.memory_space<vmem>>, vector<128x22xf32>,
    %c0_12 = arith.constant 0 : index
    %c0_13 = arith.constant 0 : index
    %15 = vector.load %arg5[%c0_12, %c0_13] : memref<1x22xf32, #tpu.memory_space<vmem>>, vector<1x22xf32>
    %cst_14 = arith.constant dense<0.000000e+00> : vector<1x128xf32>
    %16 = tpu.matmul %15, %13, %cst_14 {dimension_numbers = #tpu.dot_dimension_numbers<[1], [1], [0], [0], [0, 0, 1, 0], [], []>} : vector<1x22xf32>, vector<128x22xf32>, vector<1x128xf32> -> vector<1x128xf32>
    %c0_15 = arith.constant 0 : index
    %c0_16 = arith.constant 0 : index
    %17 = memref.load %arg6[%c0_15, %c0_16] : memref<1x1xf32, #tpu.memory_space<smem>>
    %18 = vector.broadcast %17 : f32 to vector<1x128xf32>
    %19 = arith.addf %16, %18 : vector<1x128xf32>
    %20 = arith.negf %19 : vector<1x128xf32>
    %21 = math.exp %20 : vector<1x128xf32>
    %cst_17 = arith.constant 1.000000e+00 : f32
    %22 = vector.broadcast %cst_17 : f32 to vector<1x128xf32>
    %23 = arith.addf %22, %21 : vector<1x128xf32>
    %24 = arith.divf %22, %23 : vector<1x128xf32>
    %c0_18 = arith.constant 0 : index
    %c0_19 = arith.constant 0 : index
    %25 = vector.load %arg7[%c0_18, %c0_19] : memref<1x128xf32, #tpu.memory_space<vmem>>, vector<1x128xf32>
    tpu.vector_store %arg7[%c0_18, %c0_19], %24 {strides = array<i32>} : memref<1x128xf32, #tpu.memory_space<vmem>>, vector<1x128xf32>,
    return
  }
  func.func @transform_0(%arg0: i32) -> (i32, i32) {
    %c0_i32 = arith.constant 0 : i32
    %c0_i32_0 = arith.constant 0 : i32
    return %arg0, %c0_i32 : i32, i32
  }
  func.func @transform_1(%arg0: i32) -> (i32, i32) {
    %c0_i32 = arith.constant 0 : i32
    %c0_i32_0 = arith.constant 0 : i32
    %c0_i32_1 = arith.constant 0 : i32
    return %c0_i32, %c0_i32_0 : i32, i32
  }
  func.func @transform_2(%arg0: i32) -> (i32, i32) {
    %c0_i32 = arith.constant 0 : i32
    %c0_i32_0 = arith.constant 0 : i32
    %c0_i32_1 = arith.constant 0 : i32
    return %c0_i32, %c0_i32_0 : i32, i32
  }
  func.func @transform_3(%arg0: i32) -> (i32, i32) {
    %c0_i32 = arith.constant 0 : i32
    %c0_i32_0 = arith.constant 0 : i32
    %c0_i32_1 = arith.constant 0 : i32
    return %c0_i32, %c0_i32_0 : i32, i32
  }
  func.func @transform_4(%arg0: i32) -> (i32, i32) {
    %c0_i32 = arith.constant 0 : i32
    %c0_i32_0 = arith.constant 0 : i32
    %c0_i32_1 = arith.constant 0 : i32
    return %c0_i32, %c0_i32_0 : i32, i32
  }
  func.func @transform_5(%arg0: i32) -> (i32, i32) {
    %c0_i32 = arith.constant 0 : i32
    %c0_i32_0 = arith.constant 0 : i32
    %c0_i32_1 = arith.constant 0 : i32
    return %c0_i32, %c0_i32_0 : i32, i32
  }
  func.func @transform_6(%arg0: i32) -> (i32, i32) {
    %c0_i32 = arith.constant 0 : i32
    %c0_i32_0 = arith.constant 0 : i32
    return %c0_i32, %arg0 : i32, i32
  }
  func.func @transform_7(%arg0: i32) -> (i32, i32) {
    %c0_i32 = arith.constant 0 : i32
    %c0_i32_0 = arith.constant 0 : i32
    return %arg0, %c0_i32 : i32, i32
  }
  func.func @transform_8(%arg0: i32) -> (i32, i32) {
    %c0_i32 = arith.constant 0 : i32
    %c0_i32_0 = arith.constant 0 : i32
    return %arg0, %c0_i32 : i32, i32
  }
}

</mosaic_0001>

<llo_original>
// kernel: tpu_custom_call.1
$region0: #{tpu_custom_call.1}
  #allocation0 [shape = 'u32[]', space=smem, size = 0x4, offset = 0x4, fixed_abs, tag = 'smem constant byte address 0x4 - core index']
  #allocation1 [shape = 'u32[144,128]{1,0:T(1,128)}', space=vmem, size = 0x12000, scoped, tag = 'internal scratch']
  #allocation2 [shape = 'f32[1,1]{1,0:T(1,128)S(6)}', space=smem, size = 0x200, scoped, tag = 'scoped memory for tpu_custom_call.1']
  %s0 = inlined_call_operand.vmem [shape: f32[512,500], index: 0, kind: input, shape index: {}]
  %s1 = inlined_call_operand.vmem [shape: f32[1,500], index: 1, kind: input, shape index: {}]
  %s2 = inlined_call_operand.vmem [shape: f32[500,22], index: 2, kind: input, shape index: {}]
  %s3 = inlined_call_operand.vmem [shape: f32[1,22], index: 3, kind: input, shape index: {}]
  %s4 = inlined_call_operand.vmem [shape: f32[1,22], index: 4, kind: input, shape index: {}]
  %s5 = inlined_call_operand.<no memory space> [shape: f32[1,1], index: 5, kind: input, shape index: {}]
  %s6 = inlined_call_operand.hbm [shape: f32[1,512], index: 6, kind: output, shape index: {0}]
  %s7 = inlined_call_operand.vmem [shape: f32[512,500], index: 7, kind: output, shape index: {1}]
  %s8 = inlined_call_operand.vmem [shape: f32[512,22], index: 8, kind: output, shape index: {2}]
  %9 = xla_tuple %s6, %s7, %s8
  %s10 = sld [smem:[#allocation0]]
  $region73: #{tpu_custom_call.1} parent=0
    _
  %s12 = ssub.s32 1, %s10
  %s13 = scalar_select 0, %s12, %s10
  %14 = sst [smem:[#allocation2]] %s5
  $region1: #{tpu_custom_call.1} parent=0
    #allocation3 [shape = 'u8[1024]{0}', space=vmem, size = 0x400, scoped, tag = 'output window, operand 0']
    #allocation4 [shape = 's32[2]{0}', space=sflag, size = 0x8, scoped, tag = 'scoped memory for tpu_custom_call.1']
    %15 = vsyncpa [#allocation4], 0
    %s16 = scalar_lea.sflag [#allocation4], 1
    %17 = vsyncpa %s16, 0
    loop: start=0, step=1, limit=6
    $region2: #{tpu_custom_call.1} parent=1 // loop_pre_header
      _
    $region3: #{tpu_custom_call.1} parent=1 // loop_header
      %s19 = sphi 0, %s23
      %p20 = scmp.ge.s32.totalorder %s19, 6
      %s29 = sphi 0, %s31
      %s32 = sphi 0, %s29
      %s33 = sphi 0, %s32
      %s49 = sphi 0, %s33
      %s53 = sphi 0, %s53
      %s55 = sphi 0, %s53
      %s56 = sphi 0, %s55
      %s70 = sphi 0, %s56
      %s74 = sphi 0, %s74
      %s76 = sphi 0, %s74
      %s77 = sphi 0, %s76
      %s91 = sphi 0, %s77
      %s95 = sphi 0, %s95
      %s97 = sphi 0, %s95
      %s98 = sphi 0, %s97
      %s112 = sphi 0, %s98
      %s116 = sphi 0, %s116
      %s118 = sphi 0, %s116
      %s119 = sphi 0, %s118
      %s133 = sphi 0, %s119
      %s137 = sphi 0, %s137
      %s139 = sphi 0, %s137
      %s140 = sphi 0, %s139
      %s154 = sphi 0, %s140
      %s160 = sphi 0, %s162
      %s163 = sphi 0, %s160
      %s164 = sphi 0, %s163
      %s180 = sphi 0, %s164
      %s186 = sphi 0, %s188
      %s189 = sphi 0, %s186
      %s190 = sphi 0, %s189
      %s206 = sphi 0, %s190
      %s212 = sphi 0, %s214
      %s215 = sphi 0, %s212
      %s216 = sphi 0, %s215
      %s232 = sphi 0, %s216
    $region4: #{tpu_custom_call.1} parent=1 // loop_header_branch
      %22 = sbr.rel (%p20) target = $region8
    $region5: #{tpu_custom_call.1} parent=1 // loop_body
      %s24 = ssub.s32 %s19, 1
      %s25 = ssub.s32 %s19, 2
      %s26 = sadd.s32 %s19, 1
      %s27 = ssub.s32 %s19, %s26
      %p28 = scmp.eq.s32.totalorder %s27, 0
      %s30 = sadd.s32 %s29, 1
      %s31 = scalar_select %p28, %s29, %s30
      %p34 = pneg %p28
      %p35 = scmp.eq.s32.totalorder %s19, 3
      %p36 = por %p34, %p35
      %p37 = scmp.ne.s32.totalorder %s29, %s32
      %p38 = scmp.eq.s32.totalorder %s19, 0
      %p39 = por %p37, %p38
      %p40 = scmp.ne.s32.totalorder %s29, %s32
      %p41 = scmp.eq.s32.totalorder %s24, 3
      %p42 = por %p40, %p41
      %p43 = scmp.ne.s32.totalorder %s32, %s33
      %p44 = scmp.eq.s32.totalorder %s24, 0
      %p45 = por %p43, %p44
      %p46 = scmp.ne.s32.totalorder %s32, %s33
      %p47 = scmp.eq.s32.totalorder %s25, 3
      %p48 = por %p46, %p47
      %p50 = scmp.ne.s32.totalorder %s33, %s49
      %p51 = scmp.eq.s32.totalorder %s25, 0
      %p52 = por %p50, %p51
      %s54 = sadd.s32 %s53, 1
      %p57 = scmp.eq.s32.totalorder %s19, 3
      %p58 = scmp.ne.s32.totalorder %s53, %s55
      %p59 = scmp.eq.s32.totalorder %s19, 0
      %p60 = por %p58, %p59
      %p61 = scmp.ne.s32.totalorder %s53, %s55
      %p62 = scmp.eq.s32.totalorder %s24, 3
      %p63 = por %p61, %p62
      %p64 = scmp.ne.s32.totalorder %s55, %s56
      %p65 = scmp.eq.s32.totalorder %s24, 0
      %p66 = por %p64, %p65
      %p67 = scmp.ne.s32.totalorder %s55, %s56
      %p68 = scmp.eq.s32.totalorder %s25, 3
      %p69 = por %p67, %p68
      %p71 = scmp.ne.s32.totalorder %s56, %s70
      %p72 = scmp.eq.s32.totalorder %s25, 0
      %p73 = por %p71, %p72
      %s75 = sadd.s32 %s74, 1
      %p78 = scmp.eq.s32.totalorder %s19, 3
      %p79 = scmp.ne.s32.totalorder %s74, %s76
      %p80 = scmp.eq.s32.totalorder %s19, 0
      %p81 = por %p79, %p80
      %p82 = scmp.ne.s32.totalorder %s74, %s76
      %p83 = scmp.eq.s32.totalorder %s24, 3
      %p84 = por %p82, %p83
      %p85 = scmp.ne.s32.totalorder %s76, %s77
      %p86 = scmp.eq.s32.totalorder %s24, 0
      %p87 = por %p85, %p86
      %p88 = scmp.ne.s32.totalorder %s76, %s77
      %p89 = scmp.eq.s32.totalorder %s25, 3
      %p90 = por %p88, %p89
      %p92 = scmp.ne.s32.totalorder %s77, %s91
      %p93 = scmp.eq.s32.totalorder %s25, 0
      %p94 = por %p92, %p93
      %s96 = sadd.s32 %s95, 1
      %p99 = scmp.eq.s32.totalorder %s19, 3
      %p100 = scmp.ne.s32.totalorder %s95, %s97
      %p101 = scmp.eq.s32.totalorder %s19, 0
      %p102 = por %p100, %p101
      %p103 = scmp.ne.s32.totalorder %s95, %s97
      %p104 = scmp.eq.s32.totalorder %s24, 3
      %p105 = por %p103, %p104
      %p106 = scmp.ne.s32.totalorder %s97, %s98
      %p107 = scmp.eq.s32.totalorder %s24, 0
      %p108 = por %p106, %p107
      %p109 = scmp.ne.s32.totalorder %s97, %s98
      %p110 = scmp.eq.s32.totalorder %s25, 3
      %p111 = por %p109, %p110
      %p113 = scmp.ne.s32.totalorder %s98, %s112
      %p114 = scmp.eq.s32.totalorder %s25, 0
      %p115 = por %p113, %p114
      %s117 = sadd.s32 %s116, 1
      %p120 = scmp.eq.s32.totalorder %s19, 3
      %p121 = scmp.ne.s32.totalorder %s116, %s118
      %p122 = scmp.eq.s32.totalorder %s19, 0
      %p123 = por %p121, %p122
      %p124 = scmp.ne.s32.totalorder %s116, %s118
      %p125 = scmp.eq.s32.totalorder %s24, 3
      %p126 = por %p124, %p125
      %p127 = scmp.ne.s32.totalorder %s118, %s119
      %p128 = scmp.eq.s32.totalorder %s24, 0
      %p129 = por %p127, %p128
      %p130 = scmp.ne.s32.totalorder %s118, %s119
      %p131 = scmp.eq.s32.totalorder %s25, 3
      %p132 = por %p130, %p131
      %p134 = scmp.ne.s32.totalorder %s119, %s133
      %p135 = scmp.eq.s32.totalorder %s25, 0
      %p136 = por %p134, %p135
      %s138 = sadd.s32 %s137, 1
      %p141 = scmp.eq.s32.totalorder %s19, 3
      %p142 = scmp.ne.s32.totalorder %s137, %s139
      %p143 = scmp.eq.s32.totalorder %s19, 0
      %p144 = por %p142, %p143
      %p145 = scmp.ne.s32.totalorder %s137, %s139
      %p146 = scmp.eq.s32.totalorder %s24, 3
      %p147 = por %p145, %p146
      %p148 = scmp.ne.s32.totalorder %s139, %s140
      %p149 = scmp.eq.s32.totalorder %s24, 0
      %p150 = por %p148, %p149
      %p151 = scmp.ne.s32.totalorder %s139, %s140
      %p152 = scmp.eq.s32.totalorder %s25, 3
      %p153 = por %p151, %p152
      %p155 = scmp.ne.s32.totalorder %s140, %s154
      %p156 = scmp.eq.s32.totalorder %s25, 0
      %p157 = por %p155, %p156
      %s158 = ssub.s32 %s19, %s26
      %p159 = scmp.eq.s32.totalorder %s158, 0
      %s161 = sadd.s32 %s160, 1
      %s162 = scalar_select %p159, %s160, %s161
      %p165 = pneg %p159
      %p166 = scmp.eq.s32.totalorder %s19, 3
      %p167 = por %p165, %p166
      %p168 = scmp.ne.s32.totalorder %s160, %s163
      %p169 = scmp.eq.s32.totalorder %s19, 0
      %p170 = por %p168, %p169
      %p171 = scmp.ne.s32.totalorder %s160, %s163
      %p172 = scmp.eq.s32.totalorder %s24, 3
      %p173 = por %p171, %p172
      %p174 = scmp.ne.s32.totalorder %s163, %s164
      %p175 = scmp.eq.s32.totalorder %s24, 0
      %p176 = por %p174, %p175
      %p177 = scmp.ne.s32.totalorder %s163, %s164
      %p178 = scmp.eq.s32.totalorder %s25, 3
      %p179 = por %p177, %p178
      %p181 = scmp.ne.s32.totalorder %s164, %s180
      %p182 = scmp.eq.s32.totalorder %s25, 0
      %p183 = por %p181, %p182
      %s184 = ssub.s32 %s19, %s26
      %p185 = scmp.eq.s32.totalorder %s184, 0
      %s187 = sadd.s32 %s186, 1
      %s188 = scalar_select %p185, %s186, %s187
      %p191 = pneg %p185
      %p192 = scmp.eq.s32.totalorder %s19, 3
      %p193 = por %p191, %p192
      %p194 = scmp.ne.s32.totalorder %s186, %s189
      %p195 = scmp.eq.s32.totalorder %s19, 0
      %p196 = por %p194, %p195
      %p197 = scmp.ne.s32.totalorder %s186, %s189
      %p198 = scmp.eq.s32.totalorder %s24, 3
      %p199 = por %p197, %p198
      %p200 = scmp.ne.s32.totalorder %s189, %s190
      %p201 = scmp.eq.s32.totalorder %s24, 0
      %p202 = por %p200, %p201
      %p203 = scmp.ne.s32.totalorder %s189, %s190
      %p204 = scmp.eq.s32.totalorder %s25, 3
      %p205 = por %p203, %p204
      %p207 = scmp.ne.s32.totalorder %s190, %s206
      %p208 = scmp.eq.s32.totalorder %s25, 0
      %p209 = por %p207, %p208
      %s210 = ssub.s32 %s19, %s26
      %p211 = scmp.eq.s32.totalorder %s210, 0
      %s213 = sadd.s32 %s212, 1
      %s214 = scalar_select %p211, %s212, %s213
      %p217 = pneg %p211
      %p218 = scmp.eq.s32.totalorder %s19, 3
      %p219 = por %p217, %p218
      %p220 = scmp.ne.s32.totalorder %s212, %s215
      %p221 = scmp.eq.s32.totalorder %s19, 0
      %p222 = por %p220, %p221
      %p223 = scmp.ne.s32.totalorder %s212, %s215
      %p224 = scmp.eq.s32.totalorder %s24, 3
      %p225 = por %p223, %p224
      %p226 = scmp.ne.s32.totalorder %s215, %s216
      %p227 = scmp.eq.s32.totalorder %s24, 0
      %p228 = por %p226, %p227
      %p229 = scmp.ne.s32.totalorder %s215, %s216
      %p230 = scmp.eq.s32.totalorder %s25, 3
      %p231 = por %p229, %p230
      %p233 = scmp.ne.s32.totalorder %s216, %s232
      %p234 = scmp.eq.s32.totalorder %s25, 0
      %p235 = por %p233, %p234
      %p236 = scmp.le.s32.totalorder 1, %s19
      %p237 = scmp.lt.s32.totalorder %s19, 5
      %p238 = pnand %p236, %p237
      %p239 = pneg %p238
      // Predicated region
      $region9: #{tpu_custom_call.1} parent=5 // pred_check
        _
      $region10: #{tpu_custom_call.1} parent=5 // pred_check_branch
        %241 = sbr.rel (%p238) target = $region12
      $region11: #{tpu_custom_call.1} parent=5 // pred_region
        %s242 = ssub.s32 %s19, 1
        // Predicated region
        $region13: #{tpu_custom_call.1} parent=11 // pred_check
          %p243 = pneg %p66
        $region14: #{tpu_custom_call.1} parent=11 // pred_check_branch
          %245 = sbr.rel (%p243) target = $region16
        $region15: #{tpu_custom_call.1} parent=11 // pred_region
          _
        $region16: #{tpu_custom_call.1} parent=11 // pred_fallthru
          _
        // Predicated region
        $region17: #{tpu_custom_call.1} parent=11 // pred_check
          %p246 = pneg %p87
        $region18: #{tpu_custom_call.1} parent=11 // pred_check_branch
          %248 = sbr.rel (%p246) target = $region20
        $region19: #{tpu_custom_call.1} parent=11 // pred_region
          _
        $region20: #{tpu_custom_call.1} parent=11 // pred_fallthru
          _
        // Predicated region
        $region21: #{tpu_custom_call.1} parent=11 // pred_check
          %p249 = pneg %p108
        $region22: #{tpu_custom_call.1} parent=11 // pred_check_branch
          %251 = sbr.rel (%p249) target = $region24
        $region23: #{tpu_custom_call.1} parent=11 // pred_region
          _
        $region24: #{tpu_custom_call.1} parent=11 // pred_fallthru
          _
        // Predicated region
        $region25: #{tpu_custom_call.1} parent=11 // pred_check
          %p252 = pneg %p129
        $region26: #{tpu_custom_call.1} parent=11 // pred_check_branch
          %254 = sbr.rel (%p252) target = $region28
        $region27: #{tpu_custom_call.1} parent=11 // pred_region
          _
        $region28: #{tpu_custom_call.1} parent=11 // pred_fallthru
          _
        // Predicated region
        $region29: #{tpu_custom_call.1} parent=11 // pred_check
          %p255 = pneg %p150
        $region30: #{tpu_custom_call.1} parent=11 // pred_check_branch
          %257 = sbr.rel (%p255) target = $region32
        $region31: #{tpu_custom_call.1} parent=11 // pred_region
          _
        $region32: #{tpu_custom_call.1} parent=11 // pred_fallthru
          _
      $region12: #{tpu_custom_call.1} parent=5 // pred_fallthru
        _
      %p258 = scmp.lt.s32.totalorder %s19, 4
      // Predicated region
      $region33: #{tpu_custom_call.1} parent=5 // pred_check
        %p259 = pneg %p258
      $region34: #{tpu_custom_call.1} parent=5 // pred_check_branch
        %261 = sbr.rel (%p259) target = $region36
      $region35: #{tpu_custom_call.1} parent=5 // pred_region
        // Predicated region
        $region37: #{tpu_custom_call.1} parent=35 // pred_check
          %p262 = pneg %p39
        $region38: #{tpu_custom_call.1} parent=35 // pred_check_branch
          %264 = sbr.rel (%p262) target = $region40
        $region39: #{tpu_custom_call.1} parent=35 // pred_region
          %s265 = smul.u32 16, %s19
          %p266 = scmp.lt.s32.totalorder %s265, 63
          %s267 = scalar_select %p266, %s265, 63
          %s268 = smul.addr %s267, 4
          %s269 = smul.addr %s268, 8
          %s270 = scalar_lea.vmem %s0, %s269
          %s271 = smul.u32 16, %s19
        $region40: #{tpu_custom_call.1} parent=35 // pred_fallthru
          _
      $region36: #{tpu_custom_call.1} parent=5 // pred_fallthru
        _
      %p272 = scmp.le.s32.totalorder 1, %s19
      %p273 = scmp.lt.s32.totalorder %s19, 5
      %p274 = pnand %p272, %p273
      %p275 = pneg %p274
      // Predicated region
      $region41: #{tpu_custom_call.1} parent=5 // pred_check
        _
      $region42: #{tpu_custom_call.1} parent=5 // pred_check_branch
        %277 = sbr.rel (%p274) target = $region44
      $region43: #{tpu_custom_call.1} parent=5 // pred_region
        %s278 = ssub.s32 %s19, 1
        %s279 = smul.u32 16, %s24
        %p280 = scmp.lt.s32.totalorder %s279, 63
        %s281 = scalar_select %p280, %s279, 63
        %s282 = smul.addr %s281, 4
        %s283 = smul.addr %s282, 8
        %s284 = scalar_lea.vmem %s0, %s283
        %p285 = pneg %p45
        %p286 = pneg %p42
        %p287 = pneg %p66
        %p288 = pneg %p63
        %p289 = pneg %p87
        %p290 = pneg %p84
        %p291 = pneg %p108
        %p292 = pneg %p105
        %p293 = pneg %p129
        %p294 = pneg %p126
        %p295 = pneg %p150
        %p296 = pneg %p147
        %p297 = pneg %p176
        %p298 = pneg %p173
        %s299 = sand.u32 %s163, 1
        %s300 = scalar_lea.sflag [#allocation4], %s299
        %s301 = sand.u32 %s163, 1
        %s302 = scalar_lea.vmem [#allocation3], %s301
        %p303 = pneg %p202
        %p304 = pneg %p199
        %s305 = smul.u32 16, %s24
        %p306 = scmp.lt.s32.totalorder %s305, 63
        %s307 = scalar_select %p306, %s305, 63
        %s308 = smul.addr %s307, 4
        %s309 = smul.addr %s308, 8
        %s310 = scalar_lea.vmem %s7, %s309
        %p311 = pneg %p228
        %p312 = pneg %p225
        %s313 = smul.u32 16, %s24
        %p314 = scmp.lt.s32.totalorder %s313, 63
        %s315 = scalar_select %p314, %s313, 63
        %s316 = smul.addr %s315, 8
        %s317 = scalar_lea.vmem %s8, %s316
        %s318 = smul.u32 16, %s24
        %p319 = scmp.lt.s32.totalorder %s318, 63
        %s320 = scalar_select %p319, %s318, 63
        %s321 = smul.addr %s320, 4
        %s322 = smul.addr %s321, 8
        %s323 = scalar_lea.vmem %s0, %s322
        %s324 = smul.u32 16, %s24
        %s325 = smul.u32 16, %s24
        %p326 = scmp.lt.s32.totalorder %s325, 63
        %s327 = scalar_select %p326, %s325, 63
        %s328 = smul.addr %s327, 4
        %s329 = smul.addr %s328, 8
        %s330 = scalar_lea.vmem %s7, %s329
        %s331 = smul.u32 16, %s24
        %s332 = smul.u32 16, %s24
        %p333 = scmp.lt.s32.totalorder %s332, 63
        %s334 = scalar_select %p333, %s332, 63
        %s335 = smul.addr %s334, 8
        %s336 = scalar_lea.vmem %s8, %s335
        %s337 = smul.u32 16, %s24
        %v339 = vld [vmem:[%s1] sm:$0xf]
        %v340 = vld [vmem:[%s323] sm:$0xff]
        %v341 = vld [vmem:[%s323 + $0x8] sm:$0xff]
        %v342 = vld [vmem:[%s323 + $0x10] sm:$0xff]
        %v343 = vld [vmem:[%s323 + $0x18] sm:$0xff]
        %v344 = vld [vmem:[%s323 + $0x20] sm:$0xff]
        %v345 = vld [vmem:[%s323 + $0x28] sm:$0xff]
        %v346 = vld [vmem:[%s323 + $0x30] sm:$0xff]
        %v347 = vld [vmem:[%s323 + $0x38] sm:$0xff]
        %v348 = vld [vmem:[%s323 + $0x40] sm:$0xff]
        %v349 = vld [vmem:[%s323 + $0x48] sm:$0xff]
        %v350 = vld [vmem:[%s323 + $0x50] sm:$0xff]
        %v351 = vld [vmem:[%s323 + $0x58] sm:$0xff]
        %v352 = vld [vmem:[%s323 + $0x60] sm:$0xff]
        %v353 = vld [vmem:[%s323 + $0x68] sm:$0xff]
        %v354 = vld [vmem:[%s323 + $0x70] sm:$0xff]
        %v355 = vld [vmem:[%s323 + $0x78] sm:$0xff]
        %v356 = vld [vmem:[%s323 + $0x80] sm:$0xff]
        %v357 = vld [vmem:[%s323 + $0x88] sm:$0xff]
        %v358 = vld [vmem:[%s323 + $0x90] sm:$0xff]
        %v359 = vld [vmem:[%s323 + $0x98] sm:$0xff]
        %v360 = vld [vmem:[%s323 + $0xa0] sm:$0xff]
        %v361 = vld [vmem:[%s323 + $0xa8] sm:$0xff]
        %v362 = vld [vmem:[%s323 + $0xb0] sm:$0xff]
        %v363 = vld [vmem:[%s323 + $0xb8] sm:$0xff]
        %v364 = vld [vmem:[%s323 + $0xc0] sm:$0xff]
        %v365 = vld [vmem:[%s323 + $0xc8] sm:$0xff]
        %v366 = vld [vmem:[%s323 + $0xd0] sm:$0xff]
        %v367 = vld [vmem:[%s323 + $0xd8] sm:$0xff]
        %v368 = vld [vmem:[%s323 + $0xe0] sm:$0xff]
        %v369 = vld [vmem:[%s323 + $0xe8] sm:$0xff]
        %v370 = vld [vmem:[%s323 + $0xf0] sm:$0xff]
        %v371 = vld [vmem:[%s323 + $0xf8] sm:$0xff]
        %v372 = vld [vmem:[%s323 + $0x100] sm:$0xff]
        %v373 = vld [vmem:[%s323 + $0x108] sm:$0xff]
        %v374 = vld [vmem:[%s323 + $0x110] sm:$0xff]
        %v375 = vld [vmem:[%s323 + $0x118] sm:$0xff]
        %v376 = vld [vmem:[%s323 + $0x120] sm:$0xff]
        %v377 = vld [vmem:[%s323 + $0x128] sm:$0xff]
        %v378 = vld [vmem:[%s323 + $0x130] sm:$0xff]
        %v379 = vld [vmem:[%s323 + $0x138] sm:$0xff]
        %v380 = vld [vmem:[%s323 + $0x140] sm:$0xff]
        %v381 = vld [vmem:[%s323 + $0x148] sm:$0xff]
        %v382 = vld [vmem:[%s323 + $0x150] sm:$0xff]
        %v383 = vld [vmem:[%s323 + $0x158] sm:$0xff]
        %v384 = vld [vmem:[%s323 + $0x160] sm:$0xff]
        %v385 = vld [vmem:[%s323 + $0x168] sm:$0xff]
        %v386 = vld [vmem:[%s323 + $0x170] sm:$0xff]
        %v387 = vld [vmem:[%s323 + $0x178] sm:$0xff]
        %v388 = vld [vmem:[%s323 + $0x180] sm:$0xff]
        %v389 = vld [vmem:[%s323 + $0x188] sm:$0xff]
        %v390 = vld [vmem:[%s323 + $0x190] sm:$0xff]
        %v391 = vld [vmem:[%s323 + $0x198] sm:$0xff]
        %v392 = vld [vmem:[%s323 + $0x1a0] sm:$0xff]
        %v393 = vld [vmem:[%s323 + $0x1a8] sm:$0xff]
        %v394 = vld [vmem:[%s323 + $0x1b0] sm:$0xff]
        %v395 = vld [vmem:[%s323 + $0x1b8] sm:$0xff]
        %v396 = vld [vmem:[%s323 + $0x1c0] sm:$0xff]
        %v397 = vld [vmem:[%s323 + $0x1c8] sm:$0xff]
        %v398 = vld [vmem:[%s323 + $0x1d0] sm:$0xff]
        %v399 = vld [vmem:[%s323 + $0x1d8] sm:$0xff]
        %v400 = vld [vmem:[%s323 + $0x1e0] sm:$0xff]
        %v401 = vld [vmem:[%s323 + $0x1e8] sm:$0xff]
        %v402 = vld [vmem:[%s323 + $0x1f0] sm:$0xff]
        %v403 = vld [vmem:[%s323 + $0x1f8] sm:$0xff]
        %v405 = vlaneseq
        %v406 = vshrl.u32 %v405, 7
        %v407 = vsub.s32 0, %v406
        %v408 = vrot.slane %v339, %v407
        %v409 = vlaneseq
        %v410 = vshrl.u32 %v409, 7
        %v411 = vsub.s32 1, %v410
        %v412 = vrot.slane %v339, %v411
        %v413 = vlaneseq
        %v414 = vshrl.u32 %v413, 7
        %v415 = vsub.s32 2, %v414
        %v416 = vrot.slane %v339, %v415
        %v417 = vlaneseq
        %v418 = vshrl.u32 %v417, 7
        %v419 = vsub.s32 3, %v418
        %v420 = vrot.slane %v339, %v419
        %v425 = vmul.f32 %v408, %v340
        %v426 = vmul.f32 %v412, %v341
        %v427 = vmul.f32 %v416, %v342
        %v428 = vmul.f32 %v420, %v343
        %v429 = vmul.f32 %v408, %v344
        %v430 = vmul.f32 %v412, %v345
        %v431 = vmul.f32 %v416, %v346
        %v432 = vmul.f32 %v420, %v347
        %v433 = vmul.f32 %v408, %v348
        %v434 = vmul.f32 %v412, %v349
        %v435 = vmul.f32 %v416, %v350
        %v436 = vmul.f32 %v420, %v351
        %v437 = vmul.f32 %v408, %v352
        %v438 = vmul.f32 %v412, %v353
        %v439 = vmul.f32 %v416, %v354
        %v440 = vmul.f32 %v420, %v355
        %v441 = vmul.f32 %v408, %v356
        %v442 = vmul.f32 %v412, %v357
        %v443 = vmul.f32 %v416, %v358
        %v444 = vmul.f32 %v420, %v359
        %v445 = vmul.f32 %v408, %v360
        %v446 = vmul.f32 %v412, %v361
        %v447 = vmul.f32 %v416, %v362
        %v448 = vmul.f32 %v420, %v363
        %v449 = vmul.f32 %v408, %v364
        %v450 = vmul.f32 %v412, %v365
        %v451 = vmul.f32 %v416, %v366
        %v452 = vmul.f32 %v420, %v367
        %v453 = vmul.f32 %v408, %v368
        %v454 = vmul.f32 %v412, %v369
        %v455 = vmul.f32 %v416, %v370
        %v456 = vmul.f32 %v420, %v371
        %v457 = vmul.f32 %v408, %v372
        %v458 = vmul.f32 %v412, %v373
        %v459 = vmul.f32 %v416, %v374
        %v460 = vmul.f32 %v420, %v375
        %v461 = vmul.f32 %v408, %v376
        %v462 = vmul.f32 %v412, %v377
        %v463 = vmul.f32 %v416, %v378
        %v464 = vmul.f32 %v420, %v379
        %v465 = vmul.f32 %v408, %v380
        %v466 = vmul.f32 %v412, %v381
        %v467 = vmul.f32 %v416, %v382
        %v468 = vmul.f32 %v420, %v383
        %v469 = vmul.f32 %v408, %v384
        %v470 = vmul.f32 %v412, %v385
        %v471 = vmul.f32 %v416, %v386
        %v472 = vmul.f32 %v420, %v387
        %v473 = vmul.f32 %v408, %v388
        %v474 = vmul.f32 %v412, %v389
        %v475 = vmul.f32 %v416, %v390
        %v476 = vmul.f32 %v420, %v391
        %v477 = vmul.f32 %v408, %v392
        %v478 = vmul.f32 %v412, %v393
        %v479 = vmul.f32 %v416, %v394
        %v480 = vmul.f32 %v420, %v395
        %v481 = vmul.f32 %v408, %v396
        %v482 = vmul.f32 %v412, %v397
        %v483 = vmul.f32 %v416, %v398
        %v484 = vmul.f32 %v420, %v399
        %v485 = vmul.f32 %v408, %v400
        %v486 = vmul.f32 %v412, %v401
        %v487 = vmul.f32 %v416, %v402
        %v488 = vmul.f32 %v420, %v403
        %489 = vst [vmem:[%s330] sm:$0xff] %v425
        %490 = vst [vmem:[%s330 + $0x8] sm:$0xff] %v426
        %491 = vst [vmem:[%s330 + $0x10] sm:$0xff] %v427
        %vm492 = vcmask 949248
        %493 = vst.msk [vmem:[%s330 + $0x18] sm:$0xff] %vm492, %v428
        %494 = vst [vmem:[%s330 + $0x20] sm:$0xff] %v429
        %495 = vst [vmem:[%s330 + $0x28] sm:$0xff] %v430
        %496 = vst [vmem:[%s330 + $0x30] sm:$0xff] %v431
        %497 = vst.msk [vmem:[%s330 + $0x38] sm:$0xff] %vm492, %v432
        %498 = vst [vmem:[%s330 + $0x40] sm:$0xff] %v433
        %499 = vst [vmem:[%s330 + $0x48] sm:$0xff] %v434
        %500 = vst [vmem:[%s330 + $0x50] sm:$0xff] %v435
        %501 = vst.msk [vmem:[%s330 + $0x58] sm:$0xff] %vm492, %v436
        %502 = vst [vmem:[%s330 + $0x60] sm:$0xff] %v437
        %503 = vst [vmem:[%s330 + $0x68] sm:$0xff] %v438
        %504 = vst [vmem:[%s330 + $0x70] sm:$0xff] %v439
        %505 = vst.msk [vmem:[%s330 + $0x78] sm:$0xff] %vm492, %v440
        %506 = vst [vmem:[%s330 + $0x80] sm:$0xff] %v441
        %507 = vst [vmem:[%s330 + $0x88] sm:$0xff] %v442
        %508 = vst [vmem:[%s330 + $0x90] sm:$0xff] %v443
        %509 = vst.msk [vmem:[%s330 + $0x98] sm:$0xff] %vm492, %v444
        %510 = vst [vmem:[%s330 + $0xa0] sm:$0xff] %v445
        %511 = vst [vmem:[%s330 + $0xa8] sm:$0xff] %v446
        %512 = vst [vmem:[%s330 + $0xb0] sm:$0xff] %v447
        %513 = vst.msk [vmem:[%s330 + $0xb8] sm:$0xff] %vm492, %v448
        %514 = vst [vmem:[%s330 + $0xc0] sm:$0xff] %v449
        %515 = vst [vmem:[%s330 + $0xc8] sm:$0xff] %v450
        %516 = vst [vmem:[%s330 + $0xd0] sm:$0xff] %v451
        %517 = vst.msk [vmem:[%s330 + $0xd8] sm:$0xff] %vm492, %v452
        %518 = vst [vmem:[%s330 + $0xe0] sm:$0xff] %v453
        %519 = vst [vmem:[%s330 + $0xe8] sm:$0xff] %v454
        %520 = vst [vmem:[%s330 + $0xf0] sm:$0xff] %v455
        %521 = vst.msk [vmem:[%s330 + $0xf8] sm:$0xff] %vm492, %v456
        %522 = vst [vmem:[%s330 + $0x100] sm:$0xff] %v457
        %523 = vst [vmem:[%s330 + $0x108] sm:$0xff] %v458
        %524 = vst [vmem:[%s330 + $0x110] sm:$0xff] %v459
        %525 = vst.msk [vmem:[%s330 + $0x118] sm:$0xff] %vm492, %v460
        %526 = vst [vmem:[%s330 + $0x120] sm:$0xff] %v461
        %527 = vst [vmem:[%s330 + $0x128] sm:$0xff] %v462
        %528 = vst [vmem:[%s330 + $0x130] sm:$0xff] %v463
        %529 = vst.msk [vmem:[%s330 + $0x138] sm:$0xff] %vm492, %v464
        %530 = vst [vmem:[%s330 + $0x140] sm:$0xff] %v465
        %531 = vst [vmem:[%s330 + $0x148] sm:$0xff] %v466
        %532 = vst [vmem:[%s330 + $0x150] sm:$0xff] %v467
        %533 = vst.msk [vmem:[%s330 + $0x158] sm:$0xff] %vm492, %v468
        %534 = vst [vmem:[%s330 + $0x160] sm:$0xff] %v469
        %535 = vst [vmem:[%s330 + $0x168] sm:$0xff] %v470
        %536 = vst [vmem:[%s330 + $0x170] sm:$0xff] %v471
        %537 = vst.msk [vmem:[%s330 + $0x178] sm:$0xff] %vm492, %v472
        %538 = vst [vmem:[%s330 + $0x180] sm:$0xff] %v473
        %539 = vst [vmem:[%s330 + $0x188] sm:$0xff] %v474
        %540 = vst [vmem:[%s330 + $0x190] sm:$0xff] %v475
        %541 = vst.msk [vmem:[%s330 + $0x198] sm:$0xff] %vm492, %v476
        %542 = vst [vmem:[%s330 + $0x1a0] sm:$0xff] %v477
        %543 = vst [vmem:[%s330 + $0x1a8] sm:$0xff] %v478
        %544 = vst [vmem:[%s330 + $0x1b0] sm:$0xff] %v479
        %545 = vst.msk [vmem:[%s330 + $0x1b8] sm:$0xff] %vm492, %v480
        %546 = vst [vmem:[%s330 + $0x1c0] sm:$0xff] %v481
        %547 = vst [vmem:[%s330 + $0x1c8] sm:$0xff] %v482
        %548 = vst [vmem:[%s330 + $0x1d0] sm:$0xff] %v483
        %549 = vst.msk [vmem:[%s330 + $0x1d8] sm:$0xff] %vm492, %v484
        %550 = vst [vmem:[%s330 + $0x1e0] sm:$0xff] %v485
        %551 = vst [vmem:[%s330 + $0x1e8] sm:$0xff] %v486
        %552 = vst [vmem:[%s330 + $0x1f0] sm:$0xff] %v487
        %553 = vst.msk [vmem:[%s330 + $0x1f8] sm:$0xff] %vm492, %v488
        %v554 = vpack.c.bf16 %v429, %v425
        %v555 = vpack.c.bf16 %v430, %v426
        %v556 = vpack.c.bf16 %v431, %v427
        %v557 = vpack.c.bf16 %v432, %v428
        %v558 = vpack.c.bf16 %v437, %v433
        %v559 = vpack.c.bf16 %v438, %v434
        %v560 = vpack.c.bf16 %v439, %v435
        %v561 = vpack.c.bf16 %v440, %v436
        %v562 = vpack.c.bf16 %v445, %v441
        %v563 = vpack.c.bf16 %v446, %v442
        %v564 = vpack.c.bf16 %v447, %v443
        %v565 = vpack.c.bf16 %v448, %v444
        %v566 = vpack.c.bf16 %v453, %v449
        %v567 = vpack.c.bf16 %v454, %v450
        %v568 = vpack.c.bf16 %v455, %v451
        %v569 = vpack.c.bf16 %v456, %v452
        %v570 = vpack.c.bf16 %v461, %v457
        %v571 = vpack.c.bf16 %v462, %v458
        %v572 = vpack.c.bf16 %v463, %v459
        %v573 = vpack.c.bf16 %v464, %v460
        %v574 = vpack.c.bf16 %v469, %v465
        %v575 = vpack.c.bf16 %v470, %v466
        %v576 = vpack.c.bf16 %v471, %v467
        %v577 = vpack.c.bf16 %v472, %v468
        %v578 = vpack.c.bf16 %v477, %v473
        %v579 = vpack.c.bf16 %v478, %v474
        %v580 = vpack.c.bf16 %v479, %v475
        %v581 = vpack.c.bf16 %v480, %v476
        %v582 = vpack.c.bf16 %v485, %v481
        %v583 = vpack.c.bf16 %v486, %v482
        %v584 = vpack.c.bf16 %v487, %v483
        %v585 = vpack.c.bf16 %v488, %v484
        %v586 = vld [vmem:[%s2] sm:$0xff]
        %v587 = vld [vmem:[%s2 + $0x8] sm:$0xff]
        %v588 = vld [vmem:[%s2 + $0x10] sm:$0xff]
        %v589 = vld [vmem:[%s2 + $0x18] sm:$0xff]
        %v590 = vld [vmem:[%s2 + $0x20] sm:$0xff]
        %v591 = vld [vmem:[%s2 + $0x28] sm:$0xff]
        %v592 = vld [vmem:[%s2 + $0x30] sm:$0xff]
        %v593 = vld [vmem:[%s2 + $0x38] sm:$0xff]
        %v594 = vld [vmem:[%s2 + $0x40] sm:$0xff]
        %v595 = vld [vmem:[%s2 + $0x48] sm:$0xff]
        %v596 = vld [vmem:[%s2 + $0x50] sm:$0xff]
        %v597 = vld [vmem:[%s2 + $0x58] sm:$0xff]
        %v598 = vld [vmem:[%s2 + $0x60] sm:$0xff]
        %v599 = vld [vmem:[%s2 + $0x68] sm:$0xff]
        %v600 = vld [vmem:[%s2 + $0x70] sm:$0xff]
        %v601 = vld [vmem:[%s2 + $0x78] sm:$0xff]
        %v602 = vld [vmem:[%s2 + $0x80] sm:$0xff]
        %v603 = vld [vmem:[%s2 + $0x88] sm:$0xff]
        %v604 = vld [vmem:[%s2 + $0x90] sm:$0xff]
        %v605 = vld [vmem:[%s2 + $0x98] sm:$0xff]
        %v606 = vld [vmem:[%s2 + $0xa0] sm:$0xff]
        %v607 = vld [vmem:[%s2 + $0xa8] sm:$0xff]
        %v608 = vld [vmem:[%s2 + $0xb0] sm:$0xff]
        %v609 = vld [vmem:[%s2 + $0xb8] sm:$0xff]
        %v610 = vld [vmem:[%s2 + $0xc0] sm:$0xff]
        %v611 = vld [vmem:[%s2 + $0xc8] sm:$0xff]
        %v612 = vld [vmem:[%s2 + $0xd0] sm:$0xff]
        %v613 = vld [vmem:[%s2 + $0xd8] sm:$0xff]
        %v614 = vld [vmem:[%s2 + $0xe0] sm:$0xff]
        %v615 = vld [vmem:[%s2 + $0xe8] sm:$0xff]
        %v616 = vld [vmem:[%s2 + $0xf0] sm:$0xff]
        %v617 = vld [vmem:[%s2 + $0xf8] sm:$0xff]
        %v618 = vld [vmem:[%s2 + $0x100] sm:$0xff]
        %v619 = vld [vmem:[%s2 + $0x108] sm:$0xff]
        %v620 = vld [vmem:[%s2 + $0x110] sm:$0xff]
        %v621 = vld [vmem:[%s2 + $0x118] sm:$0xff]
        %v622 = vld [vmem:[%s2 + $0x120] sm:$0xff]
        %v623 = vld [vmem:[%s2 + $0x128] sm:$0xff]
        %v624 = vld [vmem:[%s2 + $0x130] sm:$0xff]
        %v625 = vld [vmem:[%s2 + $0x138] sm:$0xff]
        %v626 = vld [vmem:[%s2 + $0x140] sm:$0xff]
        %v627 = vld [vmem:[%s2 + $0x148] sm:$0xff]
        %v628 = vld [vmem:[%s2 + $0x150] sm:$0xff]
        %v629 = vld [vmem:[%s2 + $0x158] sm:$0xff]
        %v630 = vld [vmem:[%s2 + $0x160] sm:$0xff]
        %v631 = vld [vmem:[%s2 + $0x168] sm:$0xff]
        %v632 = vld [vmem:[%s2 + $0x170] sm:$0xff]
        %v633 = vld [vmem:[%s2 + $0x178] sm:$0xff]
        %v634 = vld [vmem:[%s2 + $0x180] sm:$0xff]
        %v635 = vld [vmem:[%s2 + $0x188] sm:$0xff]
        %v636 = vld [vmem:[%s2 + $0x190] sm:$0xff]
        %v637 = vld [vmem:[%s2 + $0x198] sm:$0xff]
        %v638 = vld [vmem:[%s2 + $0x1a0] sm:$0xff]
        %v639 = vld [vmem:[%s2 + $0x1a8] sm:$0xff]
        %v640 = vld [vmem:[%s2 + $0x1b0] sm:$0xff]
        %v641 = vld [vmem:[%s2 + $0x1b8] sm:$0xff]
        %v642 = vld [vmem:[%s2 + $0x1c0] sm:$0xff]
        %v643 = vld [vmem:[%s2 + $0x1c8] sm:$0xff]
        %v644 = vld [vmem:[%s2 + $0x1d0] sm:$0xff]
        %v645 = vld [vmem:[%s2 + $0x1d8] sm:$0xff]
        %v646 = vld [vmem:[%s2 + $0x1e0] sm:$0xff]
        %v647 = vld [vmem:[%s2 + $0x1e8] sm:$0xff]
        %v648 = vld [vmem:[%s2 + $0x1f0] sm:$0xf]
        %v649 = vpack.c.bf16 %v587, %v586
        %v650 = vpack.c.bf16 %v589, %v588
        %v651 = vpack.c.bf16 %v591, %v590
        %v652 = vpack.c.bf16 %v593, %v592
        %v653 = vpack.c.bf16 %v595, %v594
        %v654 = vpack.c.bf16 %v597, %v596
        %v655 = vpack.c.bf16 %v599, %v598
        %v656 = vpack.c.bf16 %v601, %v600
        %v657 = vpack.c.bf16 %v603, %v602
        %v658 = vpack.c.bf16 %v605, %v604
        %v659 = vpack.c.bf16 %v607, %v606
        %v660 = vpack.c.bf16 %v609, %v608
        %v661 = vpack.c.bf16 %v611, %v610
        %v662 = vpack.c.bf16 %v613, %v612
        %v663 = vpack.c.bf16 %v615, %v614
        %v664 = vpack.c.bf16 %v617, %v616
        %v665 = vpack.c.bf16 %v619, %v618
        %v666 = vpack.c.bf16 %v621, %v620
        %v667 = vpack.c.bf16 %v623, %v622
        %v668 = vpack.c.bf16 %v625, %v624
        %v669 = vpack.c.bf16 %v627, %v626
        %v670 = vpack.c.bf16 %v629, %v628
        %v671 = vpack.c.bf16 %v631, %v630
        %v672 = vpack.c.bf16 %v633, %v632
        %v673 = vpack.c.bf16 %v635, %v634
        %v674 = vpack.c.bf16 %v637, %v636
        %v675 = vpack.c.bf16 %v639, %v638
        %v676 = vpack.c.bf16 %v641, %v640
        %v677 = vpack.c.bf16 %v643, %v642
        %v678 = vpack.c.bf16 %v645, %v644
        %v679 = vpack.c.bf16 %v647, %v646
        %v680 = vpack.c.bf16 %v648, %v648
        %v681 = vld [vmem:[%s3] sm:$0x1]
        %v683 = vlaneseq
        %v684 = vshrl.u32 %v683, 7
        %v685 = vsub.s32 0, %v684
        %v686 = vrot.slane %v681, %v685
        %v689 = vsel %vm492, %v557, 0
        %v692 = vsel %vm492, %v561, 0
        %v695 = vsel %vm492, %v565, 0
        %v698 = vsel %vm492, %v569, 0
        %v701 = vsel %vm492, %v573, 0
        %v704 = vsel %vm492, %v577, 0
        %v707 = vsel %vm492, %v581, 0
        %v710 = vsel %vm492, %v585, 0
        %vm712 = vcmask 1041408
        %v714 = vsel %vm712, %v680, 0
        %716 = vmatprep.subr.bf16.mxu0 0
        %717 = vmatpush1.bf16.msra.mxu0 %v656
        %718 = vmatprep.subr.bf16.mxu0 0
        %719 = vmatpush1.bf16.msra.mxu0 %v655
        %720 = vmatprep.subr.bf16.mxu0 0
        %721 = vmatpush1.bf16.msra.mxu0 %v654
        %722 = vmatprep.subr.bf16.mxu0 0
        %723 = vmatpush1.bf16.msra.mxu0 %v653
        %724 = vmatprep.subr.bf16.mxu0 0
        %725 = vmatpush1.bf16.msra.mxu0 %v652
        %726 = vmatprep.subr.bf16.mxu0 0
        %727 = vmatpush1.bf16.msra.mxu0 %v651
        %728 = vmatprep.subr.bf16.mxu0 0
        %729 = vmatpush1.bf16.msra.mxu0 %v650
        %730 = vmatprep.subr.bf16.mxu0 0
        %731 = vmatpush1.bf16.msra.mxu0 %v649
        %732 = vmatprep.subr.bf16.mxu0 0
        %733 = vmatpush2.bf16.msra.mxu0 %v664
        %734 = vmatprep.subr.bf16.mxu0 0
        %735 = vmatpush2.bf16.msra.mxu0 %v663
        %736 = vmatprep.subr.bf16.mxu0 0
        %737 = vmatpush2.bf16.msra.mxu0 %v662
        %738 = vmatprep.subr.bf16.mxu0 0
        %739 = vmatpush2.bf16.msra.mxu0 %v661
        %740 = vmatprep.subr.bf16.mxu0 0
        %741 = vmatpush2.bf16.msra.mxu0 %v660
        %742 = vmatprep.subr.bf16.mxu0 0
        %743 = vmatpush2.bf16.msra.mxu0 %v659
        %744 = vmatprep.subr.bf16.mxu0 0
        %745 = vmatpush2.bf16.msra.mxu0 %v658
        %746 = vmatprep.subr.bf16.mxu0 0
        %747 = vmatpush2.bf16.msra.mxu0 %v657
        %748 = vmatprep.mubr.bf16.mxu0 %v555
        %749 = vmatmul.mubr.bf16.gmra.mxu0 %v554
        %v750 = vpop.f32.mrf.mxu0
        %v751 = vadd.f32 %v686, %v750
        %v752 = vpop.f32.mrf.mxu0
        %v753 = vpop.f32.mrf.mxu0
        %v754 = vadd.f32 %v686, %v753
        %v755 = vpop.f32.mrf.mxu0
        %756 = vmatprep.mubr.bf16.mxu0 %v559
        %757 = vmatmul.mubr.bf16.gmra.mxu0 %v558
        %v758 = vpop.f32.mrf.mxu0
        %v759 = vadd.f32 %v686, %v758
        %v760 = vpop.f32.mrf.mxu0
        %v761 = vpop.f32.mrf.mxu0
        %v762 = vadd.f32 %v686, %v761
        %v763 = vpop.f32.mrf.mxu0
        %764 = vmatprep.mubr.bf16.mxu0 %v563
        %765 = vmatmul.mubr.bf16.gmra.mxu0 %v562
        %v766 = vpop.f32.mrf.mxu0
        %v767 = vadd.f32 %v686, %v766
        %v768 = vpop.f32.mrf.mxu0
        %v769 = vpop.f32.mrf.mxu0
        %v770 = vadd.f32 %v686, %v769
        %v771 = vpop.f32.mrf.mxu0
        %772 = vmatprep.mubr.bf16.mxu0 %v567
        %773 = vmatmul.mubr.bf16.gmra.mxu0 %v566
        %v774 = vpop.f32.mrf.mxu0
        %v775 = vadd.f32 %v686, %v774
        %v776 = vpop.f32.mrf.mxu0
        %v777 = vpop.f32.mrf.mxu0
        %v778 = vadd.f32 %v686, %v777
        %v779 = vpop.f32.mrf.mxu0
        %780 = vmatprep.mubr.bf16.mxu0 %v571
        %781 = vmatmul.mubr.bf16.gmra.mxu0 %v570
        %v782 = vpop.f32.mrf.mxu0
        %v783 = vadd.f32 %v686, %v782
        %v784 = vpop.f32.mrf.mxu0
        %v785 = vpop.f32.mrf.mxu0
        %v786 = vadd.f32 %v686, %v785
        %v787 = vpop.f32.mrf.mxu0
        %788 = vmatprep.mubr.bf16.mxu0 %v575
        %789 = vmatmul.mubr.bf16.gmra.mxu0 %v574
        %v790 = vpop.f32.mrf.mxu0
        %v791 = vadd.f32 %v686, %v790
        %v792 = vpop.f32.mrf.mxu0
        %v793 = vpop.f32.mrf.mxu0
        %v794 = vadd.f32 %v686, %v793
        %v795 = vpop.f32.mrf.mxu0
        %796 = vmatprep.mubr.bf16.mxu0 %v579
        %797 = vmatmul.mubr.bf16.gmra.mxu0 %v578
        %v798 = vpop.f32.mrf.mxu0
        %v799 = vadd.f32 %v686, %v798
        %v800 = vpop.f32.mrf.mxu0
        %v801 = vpop.f32.mrf.mxu0
        %v802 = vadd.f32 %v686, %v801
        %v803 = vpop.f32.mrf.mxu0
        %804 = vmatprep.mubr.bf16.mxu0 %v583
        %805 = vmatmul.mubr.bf16.gmra.mxu0 %v582
        %v806 = vpop.f32.mrf.mxu0
        %v807 = vadd.f32 %v686, %v806
        %v808 = vpop.f32.mrf.mxu0
        %v809 = vpop.f32.mrf.mxu0
        %v810 = vadd.f32 %v686, %v809
        %v811 = vpop.f32.mrf.mxu0
        %812 = vdwg.mxu0
        %813 = vmatprep.subr.bf16.mxu0 0
        %814 = vmatpush1.bf16.msra.mxu0 %v672
        %815 = vmatprep.subr.bf16.mxu0 0
        %816 = vmatpush1.bf16.msra.mxu0 %v671
        %817 = vmatprep.subr.bf16.mxu0 0
        %818 = vmatpush1.bf16.msra.mxu0 %v670
        %819 = vmatprep.subr.bf16.mxu0 0
        %820 = vmatpush1.bf16.msra.mxu0 %v669
        %821 = vmatprep.subr.bf16.mxu0 0
        %822 = vmatpush1.bf16.msra.mxu0 %v668
        %823 = vmatprep.subr.bf16.mxu0 0
        %824 = vmatpush1.bf16.msra.mxu0 %v667
        %825 = vmatprep.subr.bf16.mxu0 0
        %826 = vmatpush1.bf16.msra.mxu0 %v666
        %827 = vmatprep.subr.bf16.mxu0 0
        %828 = vmatpush1.bf16.msra.mxu0 %v665
        %829 = vmatprep.subr.bf16.mxu0 0
        %830 = vmatpush2.bf16.msra.mxu0 %v714
        %831 = vmatprep.subr.bf16.mxu0 0
        %832 = vmatpush2.bf16.msra.mxu0 %v679
        %833 = vmatprep.subr.bf16.mxu0 0
        %834 = vmatpush2.bf16.msra.mxu0 %v678
        %835 = vmatprep.subr.bf16.mxu0 0
        %836 = vmatpush2.bf16.msra.mxu0 %v677
        %837 = vmatprep.subr.bf16.mxu0 0
        %838 = vmatpush2.bf16.msra.mxu0 %v676
        %839 = vmatprep.subr.bf16.mxu0 0
        %840 = vmatpush2.bf16.msra.mxu0 %v675
        %841 = vmatprep.subr.bf16.mxu0 0
        %842 = vmatpush2.bf16.msra.mxu0 %v674
        %843 = vmatprep.subr.bf16.mxu0 0
        %844 = vmatpush2.bf16.msra.mxu0 %v673
        %845 = vmatprep.mubr.bf16.mxu0 %v689
        %846 = vmatmul.mubr.bf16.gmra.mxu0 %v556
        %v847 = vpop.f32.mrf.mxu0
        %v848 = vadd.f32 %v751, %v847
        %v849 = vpop.f32.mrf.mxu0
        %v850 = vpop.f32.mrf.mxu0
        %v851 = vadd.f32 %v754, %v850
        %v852 = vpop.f32.mrf.mxu0
        %853 = vmatprep.mubr.bf16.mxu0 %v692
        %854 = vmatmul.mubr.bf16.gmra.mxu0 %v560
        %v855 = vpop.f32.mrf.mxu0
        %v856 = vadd.f32 %v759, %v855
        %v857 = vpop.f32.mrf.mxu0
        %v858 = vpop.f32.mrf.mxu0
        %v859 = vadd.f32 %v762, %v858
        %v860 = vpop.f32.mrf.mxu0
        %861 = vmatprep.mubr.bf16.mxu0 %v695
        %862 = vmatmul.mubr.bf16.gmra.mxu0 %v564
        %v863 = vpop.f32.mrf.mxu0
        %v864 = vadd.f32 %v767, %v863
        %v865 = vpop.f32.mrf.mxu0
        %v866 = vpop.f32.mrf.mxu0
        %v867 = vadd.f32 %v770, %v866
        %v868 = vpop.f32.mrf.mxu0
        %869 = vmatprep.mubr.bf16.mxu0 %v698
        %870 = vmatmul.mubr.bf16.gmra.mxu0 %v568
        %v871 = vpop.f32.mrf.mxu0
        %v872 = vadd.f32 %v775, %v871
        %v873 = vpop.f32.mrf.mxu0
        %v874 = vpop.f32.mrf.mxu0
        %v875 = vadd.f32 %v778, %v874
        %v876 = vpop.f32.mrf.mxu0
        %877 = vmatprep.mubr.bf16.mxu0 %v701
        %878 = vmatmul.mubr.bf16.gmra.mxu0 %v572
        %v879 = vpop.f32.mrf.mxu0
        %v880 = vadd.f32 %v783, %v879
        %v881 = vpop.f32.mrf.mxu0
        %v882 = vpop.f32.mrf.mxu0
        %v883 = vadd.f32 %v786, %v882
        %v884 = vpop.f32.mrf.mxu0
        %885 = vmatprep.mubr.bf16.mxu0 %v704
        %886 = vmatmul.mubr.bf16.gmra.mxu0 %v576
        %v887 = vpop.f32.mrf.mxu0
        %v888 = vadd.f32 %v791, %v887
        %v889 = vpop.f32.mrf.mxu0
        %v890 = vpop.f32.mrf.mxu0
        %v891 = vadd.f32 %v794, %v890
        %v892 = vpop.f32.mrf.mxu0
        %893 = vmatprep.mubr.bf16.mxu0 %v707
        %894 = vmatmul.mubr.bf16.gmra.mxu0 %v580
        %v895 = vpop.f32.mrf.mxu0
        %v896 = vadd.f32 %v799, %v895
        %v897 = vpop.f32.mrf.mxu0
        %v898 = vpop.f32.mrf.mxu0
        %v899 = vadd.f32 %v802, %v898
        %v900 = vpop.f32.mrf.mxu0
        %901 = vmatprep.mubr.bf16.mxu0 %v710
        %902 = vmatmul.mubr.bf16.gmra.mxu0 %v584
        %v903 = vpop.f32.mrf.mxu0
        %v904 = vadd.f32 %v807, %v903
        %v905 = vpop.f32.mrf.mxu0
        %v906 = vpop.f32.mrf.mxu0
        %v907 = vadd.f32 %v810, %v906
        %v908 = vpop.f32.mrf.mxu0
        %909 = vdwg.mxu0
        %v910 = vmax.f32 %v848, 0.0
        %v911 = vmax.f32 %v851, 0.0
        %v912 = vmax.f32 %v856, 0.0
        %v913 = vmax.f32 %v859, 0.0
        %v914 = vmax.f32 %v864, 0.0
        %v915 = vmax.f32 %v867, 0.0
        %v916 = vmax.f32 %v872, 0.0
        %v917 = vmax.f32 %v875, 0.0
        %v918 = vmax.f32 %v880, 0.0
        %v919 = vmax.f32 %v883, 0.0
        %v920 = vmax.f32 %v888, 0.0
        %v921 = vmax.f32 %v891, 0.0
        %v922 = vmax.f32 %v896, 0.0
        %v923 = vmax.f32 %v899, 0.0
        %v924 = vmax.f32 %v904, 0.0
        %v925 = vmax.f32 %v907, 0.0
        %vm926 = vcmask 179200
        %927 = vst.msk [vmem:[%s336] sm:$0xff] %vm926, %v910
        %928 = vst.msk [vmem:[%s336 + $0x8] sm:$0xff] %vm926, %v911
        %929 = vst.msk [vmem:[%s336 + $0x10] sm:$0xff] %vm926, %v912
        %930 = vst.msk [vmem:[%s336 + $0x18] sm:$0xff] %vm926, %v913
        %931 = vst.msk [vmem:[%s336 + $0x20] sm:$0xff] %vm926, %v914
        %932 = vst.msk [vmem:[%s336 + $0x28] sm:$0xff] %vm926, %v915
        %933 = vst.msk [vmem:[%s336 + $0x30] sm:$0xff] %vm926, %v916
        %934 = vst.msk [vmem:[%s336 + $0x38] sm:$0xff] %vm926, %v917
        %935 = vst.msk [vmem:[%s336 + $0x40] sm:$0xff] %vm926, %v918
        %936 = vst.msk [vmem:[%s336 + $0x48] sm:$0xff] %vm926, %v919
        %937 = vst.msk [vmem:[%s336 + $0x50] sm:$0xff] %vm926, %v920
        %938 = vst.msk [vmem:[%s336 + $0x58] sm:$0xff] %vm926, %v921
        %939 = vst.msk [vmem:[%s336 + $0x60] sm:$0xff] %vm926, %v922
        %940 = vst.msk [vmem:[%s336 + $0x68] sm:$0xff] %vm926, %v923
        %941 = vst.msk [vmem:[%s336 + $0x70] sm:$0xff] %vm926, %v924
        %942 = vst.msk [vmem:[%s336 + $0x78] sm:$0xff] %vm926, %v925
        %v943 = vld [vmem:[%s4] sm:$0x1]
        %s944 = sld [smem:[#allocation2]]
        %v945 = vstv %s944
        %v947 = vsel %vm926, %v943, 0
        %v950 = vsel %vm926, %v910, 0
        %v953 = vsel %vm926, %v911, 0
        %v956 = vsel %vm926, %v912, 0
        %v959 = vsel %vm926, %v913, 0
        %v962 = vsel %vm926, %v914, 0
        %v965 = vsel %vm926, %v915, 0
        %v968 = vsel %vm926, %v916, 0
        %v971 = vsel %vm926, %v917, 0
        %v974 = vsel %vm926, %v918, 0
        %v977 = vsel %vm926, %v919, 0
        %v980 = vsel %vm926, %v920, 0
        %v983 = vsel %vm926, %v921, 0
        %v986 = vsel %vm926, %v922, 0
        %v989 = vsel %vm926, %v923, 0
        %v992 = vsel %vm926, %v924, 0
        %v995 = vsel %vm926, %v925, 0
        %997 = vmatprep.subr.mxu0 0.0
        %998 = vmatpush1.xpose.msra.mxu0 %v995
        %999 = vmatprep.subr.mxu0 0.0
        %1000 = vmatpush1.xpose.msra.mxu0 %v992
        %1001 = vmatprep.subr.mxu0 0.0
        %1002 = vmatpush1.xpose.msra.mxu0 %v989
        %1003 = vmatprep.subr.mxu0 0.0
        %1004 = vmatpush1.xpose.msra.mxu0 %v986
        %1005 = vmatprep.subr.mxu0 0.0
        %1006 = vmatpush1.xpose.msra.mxu0 %v983
        %1007 = vmatprep.subr.mxu0 0.0
        %1008 = vmatpush1.xpose.msra.mxu0 %v980
        %1009 = vmatprep.subr.mxu0 0.0
        %1010 = vmatpush1.xpose.msra.mxu0 %v977
        %1011 = vmatprep.subr.mxu0 0.0
        %1012 = vmatpush1.xpose.msra.mxu0 %v974
        %1013 = vmatprep.subr.mxu0 0.0
        %1014 = vmatpush1.xpose.msra.mxu0 %v971
        %1015 = vmatprep.subr.mxu0 0.0
        %1016 = vmatpush1.xpose.msra.mxu0 %v968
        %1017 = vmatprep.subr.mxu0 0.0
        %1018 = vmatpush1.xpose.msra.mxu0 %v965
        %1019 = vmatprep.subr.mxu0 0.0
        %1020 = vmatpush1.xpose.msra.mxu0 %v962
        %1021 = vmatprep.subr.mxu0 0.0
        %1022 = vmatpush1.xpose.msra.mxu0 %v959
        %1023 = vmatprep.subr.mxu0 0.0
        %1024 = vmatpush1.xpose.msra.mxu0 %v956
        %1025 = vmatprep.subr.mxu0 0.0
        %1026 = vmatpush1.xpose.msra.mxu0 %v953
        %1027 = vmatprep.subr.mxu0 0.0
        %1028 = vmatpush1.xpose.msra.mxu0 %v950
        %1029 = vmatprep.subr.mxu0 0.0
        %1030 = vmatpush2.xpose.msra.mxu0 0.0
        %1031 = vmatprep.subr.mxu0 0.0
        %1032 = vmatpush2.xpose.msra.mxu0 0.0
        %1033 = vmatprep.subr.mxu0 0.0
        %1034 = vmatpush2.xpose.msra.mxu0 0.0
        %1035 = vmatprep.subr.mxu0 0.0
        %1036 = vmatpush2.xpose.msra.mxu0 0.0
        %1037 = vmatprep.subr.mxu0 0.0
        %1038 = vmatpush2.xpose.msra.mxu0 0.0
        %1039 = vmatprep.subr.mxu0 0.0
        %1040 = vmatpush2.xpose.msra.mxu0 0.0
        %1041 = vmatprep.subr.mxu0 0.0
        %1042 = vmatpush2.xpose.msra.mxu0 0.0
        %1043 = vmatprep.subr.mxu0 0.0
        %1044 = vmatpush2.xpose.msra.mxu0 0.0
        %1045 = vmatprep.subr.mxu0 0.0
        %1046 = vmatpush2.xpose.msra.mxu0 0.0
        %1047 = vmatprep.subr.mxu0 0.0
        %1048 = vmatpush2.xpose.msra.mxu0 0.0
        %1049 = vmatprep.subr.mxu0 0.0
        %1050 = vmatpush2.xpose.msra.mxu0 0.0
        %1051 = vmatprep.subr.mxu0 0.0
        %1052 = vmatpush2.xpose.msra.mxu0 0.0
        %1053 = vmatprep.subr.mxu0 0.0
        %1054 = vmatpush2.xpose.msra.mxu0 0.0
        %1055 = vmatprep.subr.mxu0 0.0
        %1056 = vmatpush2.xpose.msra.mxu0 0.0
        %1057 = vmatprep.subr.mxu0 0.0
        %1058 = vmatpush2.xpose.msra.mxu0 0.0
        %1059 = vmatprep.subr.mxu0 0.0
        %1060 = vmatpush2.xpose.msra.mxu0 0.0
        %1061 = vmatprep.mubr.f32.mxu0 0.0
        %1062 = vmatmul.mubr.f32.gmra.mxu0 %v947
        %v1063 = vpop.f32.mrf.mxu0
        %v1064 = vadd.f32 %v945, %v1063
        %v1065 = vpop.f32.mrf.mxu0
        %1066 = vdwg.mxu0
        %v1067 = vxor.u32 %v1064, 2147483648
        %v1068 = vmul.f32 %v1067, 1.442695
        %v1069 = vpow.pop %v1068
        %v1070 = vadd.f32 %v1069, 1.0
        %v1071 = vrcp.pop %v1070
        %v1072 = vmul.f32 1.0, %v1071
        %1073 = vst [vmem:[%s302] sm:$0x1] %v1072
        %s1074 = sand.u32 %s163, 1
        %s1075 = scalar_lea.sflag [#allocation4], %s1074
        %s1076 = sand.u32 %s163, 1
        %s1077 = scalar_lea.vmem [#allocation3], %s1076
        %s1078 = smul.u32 16, %s24
        %p1079 = scmp.lt.s32.totalorder %s1078, 63
        %s1080 = scalar_select %p1079, %s1078, 63
        %s1081 = smul.addr %s1080, 4
        %s1082 = smul.addr %s1081, 8
        %s1083 = scalar_lea.vmem %s7, %s1082
        %s1084 = smul.u32 16, %s24
        %p1085 = scmp.lt.s32.totalorder %s1084, 63
        %s1086 = scalar_select %p1085, %s1084, 63
        %s1087 = smul.addr %s1086, 8
        %s1088 = scalar_lea.vmem %s8, %s1087
        // Predicated region
        $region45: #{tpu_custom_call.1} parent=43 // pred_check
          %p1089 = pneg %p173
        $region46: #{tpu_custom_call.1} parent=43 // pred_check_branch
          %1091 = sbr.rel (%p1089) target = $region48
        $region47: #{tpu_custom_call.1} parent=43 // pred_region
          %s1093 = ssub.s32 16, 16
          %1094 = vsyncadd %s1075, %s1093
          %s1095 = smul.addr %s24, 16
          %s1096 = scalar_lea.hbm %s6, %s1095
          %s1098 = sshll.u32 %s1077, 4
          %s1099 = int_to_ptr.vmem [resolvable:$true] %s1098
          %1101 = dma.vmem_to_hbm [thread:$0]  %s1099, 16, %s1096, %s1075
        $region48: #{tpu_custom_call.1} parent=43 // pred_fallthru
          _
        // Predicated region
        $region49: #{tpu_custom_call.1} parent=43 // pred_check
          %p1102 = pneg %p199
        $region50: #{tpu_custom_call.1} parent=43 // pred_check_branch
          %1104 = sbr.rel (%p1102) target = $region52
        $region51: #{tpu_custom_call.1} parent=43 // pred_region
          %s1105 = smul.u32 16, %s24
        $region52: #{tpu_custom_call.1} parent=43 // pred_fallthru
          _
        // Predicated region
        $region53: #{tpu_custom_call.1} parent=43 // pred_check
          %p1106 = pneg %p225
        $region54: #{tpu_custom_call.1} parent=43 // pred_check_branch
          %1108 = sbr.rel (%p1106) target = $region56
        $region55: #{tpu_custom_call.1} parent=43 // pred_region
          %s1109 = smul.u32 16, %s24
        $region56: #{tpu_custom_call.1} parent=43 // pred_fallthru
          _
      $region44: #{tpu_custom_call.1} parent=5 // pred_fallthru
        _
      %p1110 = scmp.le.s32.totalorder 2, %s19
      // Predicated region
      $region57: #{tpu_custom_call.1} parent=5 // pred_check
        %p1111 = pneg %p1110
      $region58: #{tpu_custom_call.1} parent=5 // pred_check_branch
        %1113 = sbr.rel (%p1111) target = $region60
      $region59: #{tpu_custom_call.1} parent=5 // pred_region
        %s1114 = ssub.s32 %s19, 2
        // Predicated region
        $region61: #{tpu_custom_call.1} parent=59 // pred_check
          %p1115 = pneg %p179
        $region62: #{tpu_custom_call.1} parent=59 // pred_check_branch
          %1117 = sbr.rel (%p1115) target = $region64
        $region63: #{tpu_custom_call.1} parent=59 // pred_region
          %s1118 = sand.u32 %s164, 1
          %s1119 = scalar_lea.sflag [#allocation4], %s1118
          %s1120 = sand.u32 %s164, 1
          %s1121 = scalar_lea.vmem [#allocation3], %s1120
          %1122 = dma.done %s1119, 16
        $region64: #{tpu_custom_call.1} parent=59 // pred_fallthru
          _
        // Predicated region
        $region65: #{tpu_custom_call.1} parent=59 // pred_check
          %p1123 = pneg %p205
        $region66: #{tpu_custom_call.1} parent=59 // pred_check_branch
          %1125 = sbr.rel (%p1123) target = $region68
        $region67: #{tpu_custom_call.1} parent=59 // pred_region
          %s1126 = smul.u32 16, %s25
          %p1127 = scmp.lt.s32.totalorder %s1126, 63
          %s1128 = scalar_select %p1127, %s1126, 63
          %s1129 = smul.addr %s1128, 4
          %s1130 = smul.addr %s1129, 8
          %s1131 = scalar_lea.vmem %s7, %s1130
        $region68: #{tpu_custom_call.1} parent=59 // pred_fallthru
          _
        // Predicated region
        $region69: #{tpu_custom_call.1} parent=59 // pred_check
          %p1132 = pneg %p231
        $region70: #{tpu_custom_call.1} parent=59 // pred_check_branch
          %1134 = sbr.rel (%p1132) target = $region72
        $region71: #{tpu_custom_call.1} parent=59 // pred_region
          %s1135 = smul.u32 16, %s25
          %p1136 = scmp.lt.s32.totalorder %s1135, 63
          %s1137 = scalar_select %p1136, %s1135, 63
          %s1138 = smul.addr %s1137, 8
          %s1139 = scalar_lea.vmem %s8, %s1138
        $region72: #{tpu_custom_call.1} parent=59 // pred_fallthru
          _
      $region60: #{tpu_custom_call.1} parent=5 // pred_fallthru
        _
    $region6: #{tpu_custom_call.1} parent=1 // loop_footer
      %s23 = sadd.s32 1, %s19
    $region7: #{tpu_custom_call.1} parent=1 // loop_footer_branch
      %18 = sbr.rel target = $region3
    $region8: #{tpu_custom_call.1} parent=1 // loop_exit
      _
    %1140 = vsyncpa [#allocation4], 1
    %s1141 = scalar_lea.sflag [#allocation4], 1
    %1142 = vsyncpa %s1141, 1

</llo_original>
